<compile_context>
chip_gen: v6e
topology: v6e:2x2x1
jax: 0.10.0
libtpu: 0.0.40
codegen_flags: <defaults>
</compile_context>

<pallas_src>
import jax
import jax.numpy as jnp
from jax.experimental import pallas as pl
from jax.experimental.pallas import tpu as pltpu


def _round_up(x, m):
    return ((x + m - 1) // m) * m


def _tpu_vmem_capacity_bytes():
    try:
        return int(getattr(pltpu.get_tpu_info(), "vmem_capacity_bytes", 64 << 20))
    except Exception:
        return 64 << 20  # conservative (v7x-sized) fallback


# ----------------------------- kernels --------------------------------------

def _make_fused_kernel():
    """Block-diagonal second GEMM; best for small n_way (pad cost negligible)."""

    def kernel(x_ref, w1_ref, b1_ref, w2_ref, b2_ref, mask_ref, out_ref):
        # Fused first layer for BOTH heads: (TB, dim) @ (dim, 2H) -> (TB, 2H)
        h = jnp.dot(x_ref[...], w1_ref[...], preferred_element_type=jnp.float32)
        h = jnp.maximum(h + b1_ref[0, :], 0.0)                      # ReLU in f32

        # Block-diagonal second layer -> lane-dense (TB, OUT_PAD) slab:
        #   lanes [0, n_way)          head-1 logits
        #   lanes [n_way, 2*n_way)    head-2 logits
        #   lanes [2*n_way, OUT_PAD)  exact zeros (zero w2 cols / zero b2)
        y = jnp.dot(h.astype(w2_ref.dtype), w2_ref[...],
                    preferred_element_type=jnp.float32) + b2_ref[0, :]

        # Per-head L2 normalization (F.normalize eps=1e-12). Head masks are a
        # precomputed operand (no per-step iota/compare chain); pad lanes are
        # exactly zero so s2 = total - s1 saves one masked reduction.
        sq = y * y
        m1 = mask_ref[0:1, :]
        m2 = mask_ref[1:2, :]
        total = jnp.sum(sq, axis=-1, keepdims=True)
        s1 = jnp.sum(sq * m1, axis=-1, keepdims=True)
        s2 = total - s1
        eps2 = jnp.float32(1e-24)                                   # (1e-12)**2
        inv1 = jax.lax.rsqrt(jnp.maximum(s1, eps2))                 # EUP
        inv2 = jax.lax.rsqrt(jnp.maximum(s2, eps2))                 # EUP
        scale = m1 * inv1 + m2 * inv2                               # 0 on pad lanes
        out_ref[...] = (y * scale).astype(out_ref.dtype)            # single dense store

    return kernel


def _make_split_kernel(n_way, dim_hidden):
    """Two second-layer GEMMs writing adjacent lane blocks.

    Used when n_way is a multiple of 128: the block-diagonal operand would be
    half zeros (2x MXU work, 2x w2 VMEM) and each head's lane block is already
    128-aligned, so two unmasked lane-dense stores suffice.
    """
    H = dim_hidden

    def kernel(x_ref, w1_ref, b1_ref, w2a_ref, w2b_ref, b2_ref, out_ref):
        h = jnp.dot(x_ref[...], w1_ref[...], preferred_element_type=jnp.float32)
        h = jnp.maximum(h + b1_ref[0, :], 0.0)
        h = h.astype(w2a_ref.dtype)
        eps2 = jnp.float32(1e-24)

        y1 = jnp.dot(h[:, :H], w2a_ref[...],
                     preferred_element_type=jnp.float32) + b2_ref[0:1, :n_way]
        inv1 = jax.lax.rsqrt(
            jnp.maximum(jnp.sum(y1 * y1, axis=-1, keepdims=True), eps2))
        out_ref[:, :n_way] = (y1 * inv1).astype(out_ref.dtype)

        y2 = jnp.dot(h[:, H:], w2b_ref[...],
                     preferred_element_type=jnp.float32) + b2_ref[0:1, n_way:]
        inv2 = jax.lax.rsqrt(
            jnp.maximum(jnp.sum(y2 * y2, axis=-1, keepdims=True), eps2))
        out_ref[:, n_way:] = (y2 * inv2).astype(out_ref.dtype)

    return kernel


# --------------------------- operand packing ---------------------------------

def _pack_params_fused(params, n_way, out_pad, compute_dtype):
    dim, H = params["w1a"].shape
    w1 = jnp.concatenate([params["w1a"], params["w1b"]], axis=1)      # (dim, 2H)
    b1 = jnp.concatenate([params["b1a"], params["b1b"]], axis=1)      # (1, 2H) f32

    w2 = jnp.zeros((2 * H, out_pad), jnp.float32)
    w2 = w2.at[:H, :n_way].set(params["w2a"])
    w2 = w2.at[H:, n_way:2 * n_way].set(params["w2b"])                # (2H, OUT_PAD)

    b2 = jnp.zeros((1, out_pad), jnp.float32)
    b2 = b2.at[0, :n_way].set(params["b2a"][0])
    b2 = b2.at[0, n_way:2 * n_way].set(params["b2b"][0])

    mask = jnp.zeros((2, out_pad), jnp.float32)
    mask = mask.at[0, :n_way].set(1.0)
    mask = mask.at[1, n_way:2 * n_way].set(1.0)

    # TODO(synk): on v7x, w1/w2 could be pre-quantized to fp8 (bf16/int8 on
    # v5e/v6e); kept at f32/bf16 here since the chip generation is not gated.
    return (w1.astype(compute_dtype), b1, w2.astype(compute_dtype), b2, mask)


def _pack_params_split(params, compute_dtype):
    w1 = jnp.concatenate([params["w1a"], params["w1b"]], axis=1)      # (dim, 2H)
    b1 = jnp.concatenate([params["b1a"], params["b1b"]], axis=1)      # (1, 2H)
    b2 = jnp.concatenate([params["b2a"], params["b2b"]], axis=1)      # (1, 2*n_way)
    return (w1.astype(compute_dtype), b1,
            params["w2a"].astype(compute_dtype),
            params["w2b"].astype(compute_dtype), b2)


# ------------------------------ wrapper --------------------------------------

def classifier_d_forward(x, params, *, block_b=1024, compute_dtype=jnp.float32,
                         out_dtype=jnp.float32, return_padded=False):
    """x: (B, dim). Returns (B, 2*n_way) in out_dtype (or the padded slab)."""
    B, dim = x.shape
    H = params["w1a"].shape[1]
    n_way = params["w2a"].shape[1]

    itemc = jnp.dtype(compute_dtype).itemsize
    itemo = jnp.dtype(out_dtype).itemsize

    # Split second GEMM when each head is already lane-aligned and large enough
    # that a half-zero block-diagonal operand would waste MXU work / VMEM.
    split = (n_way % 128 == 0) and (n_way >= 128)
    out_pad = 2 * n_way if split else max(128, _round_up(2 * n_way, 128))

    # Batch tile: as large as possible (fewer ~0.35us grid steps) but
    #  * sublane-aligned for the narrowest dtype in play (16 for bf16 packing),
    #  * >= 2 grid steps whenever the batch can be split, so ("parallel",)
    #    actually shards across v7x's two TensorCores,
    #  * small enough that double-buffered x/out tiles fit the VMEM budget.
    sub = 16 if min(itemc, itemo) < 4 else 8
    B_ceil = _round_up(B, sub)
    TB = min(_round_up(block_b, sub), B_ceil)
    if B_ceil >= 2 * sub:
        TB = min(TB, _round_up((B_ceil + 1) // 2, sub))

    phys_vmem = _tpu_vmem_capacity_bytes()
    cap = (phys_vmem * 3) // 4                 # ~48 MiB (v7x) / ~96 MiB (v5e/v6e)
    if split:
        w_bytes = (dim * 2 * H + 2 * H * n_way) * itemc + (2 * H + 2 * n_way) * 4
    else:
        w_bytes = (dim * 2 * H + 2 * H * out_pad) * itemc + (2 * H + 3 * out_pad) * 4

    def tile_bytes(tb):
        return 2 * tb * (dim * itemc + out_pad * itemo)   # double-buffered x + out

    budget = cap - 2 * w_bytes - (8 << 20)
    while TB > sub and tile_bytes(TB) > budget:
        TB = max(sub, _round_up(TB // 2, sub))

    B_pad = _round_up(B_ceil, TB)
    if B_pad != B:
        x = jnp.pad(x, ((0, B_pad - B), (0, 0)))
    x = x.astype(compute_dtype)

    grid = (B_pad // TB,)
    vmem_limit = int(min(max(w_bytes + tile_bytes(TB) * 3 // 2 + (4 << 20),
                             32 << 20), cap))

    resident = dict(pipeline_mode=pl.Buffered(1))   # constant blocks: 1 buffer

    if split:
        w1, b1, w2a, w2b, b2 = _pack_params_split(params, compute_dtype)
        kernel = _make_split_kernel(n_way, H)
        in_specs = [
            pl.BlockSpec((TB, dim), lambda i: (i, 0)),
            pl.BlockSpec((dim, 2 * H), lambda i: (0, 0), **resident),
            pl.BlockSpec((1, 2 * H), lambda i: (0, 0), **resident),
            pl.BlockSpec((H, n_way), lambda i: (0, 0), **resident),
            pl.BlockSpec((H, n_way), lambda i: (0, 0), **resident),
            pl.BlockSpec((1, 2 * n_way), lambda i: (0, 0), **resident),
        ]
        args = (x, w1, b1, w2a, w2b, b2)
    else:
        w1, b1, w2, b2, mask = _pack_params_fused(params, n_way, out_pad,
                                                  compute_dtype)
        kernel = _make_fused_kernel()
        in_specs = [
            pl.BlockSpec((TB, dim), lambda i: (i, 0)),
            pl.BlockSpec((dim, 2 * H), lambda i: (0, 0), **resident),
            pl.BlockSpec((1, 2 * H), lambda i: (0, 0), **resident),
            pl.BlockSpec((2 * H, out_pad), lambda i: (0, 0), **resident),
            pl.BlockSpec((1, out_pad), lambda i: (0, 0), **resident),
            pl.BlockSpec((2, out_pad), lambda i: (0, 0), **resident),
        ]
        args = (x, w1, b1, w2, b2, mask)

    out = pl.pallas_call(
        kernel,
        out_shape=jax.ShapeDtypeStruct((B_pad, out_pad), out_dtype),
        grid=grid,
        in_specs=in_specs,
        out_specs=pl.BlockSpec((TB, out_pad), lambda i: (i, 0)),
        compiler_params=pltpu.CompilerParams(
            dimension_semantics=("parallel",),      # megacore / 2-TC (v7x)
            vmem_limit_bytes=vmem_limit,
        ),
    )(*args)

    if return_padded:
        # Consumer can slice / fuse the de-pad itself (skips an extra HBM pass).
        return out
    return out[:B, :2 * n_way]


# ------------------------- init / reference / test ---------------------------

def init_params(key, dim, dim_hidden, n_way):
    """Deterministic synthetic init; weights stored as (in, out), biases (1, out)."""
    ks = jax.random.split(key, 8)
    s1 = 1.0 / jnp.sqrt(dim)
    s2 = 1.0 / jnp.sqrt(dim_hidden)
    return {
        "w1a": jax.random.uniform(ks[0], (dim, dim_hidden), jnp.float32, -s1, s1),
        "b1a": jax.random.uniform(ks[1], (1, dim_hidden), jnp.float32, -s1, s1),
        "w2a": jax.random.uniform(ks[2], (dim_hidden, n_way), jnp.float32, -s2, s2),
        "b2a": jax.random.uniform(ks[3], (1, n_way), jnp.float32, -s2, s2),
        "w1b": jax.random.uniform(ks[4], (dim, dim_hidden), jnp.float32, -s1, s1),
        "b1b": jax.random.uniform(ks[5], (1, dim_hidden), jnp.float32, -s1, s1),
        "w2b": jax.random.uniform(ks[6], (dim_hidden, n_way), jnp.float32, -s2, s2),
        "b2b": jax.random.uniform(ks[7], (1, n_way), jnp.float32, -s2, s2),
    }


def _reference(x, p):
    """Pure-JAX reference matching the PyTorch forward (dropout = identity)."""
    def head(w1, b1, w2, b2):
        h = jnp.maximum(x @ w1 + b1[0], 0.0)
        y = h @ w2 + b2[0]
        n = jnp.sqrt(jnp.sum(y * y, axis=-1, keepdims=True))
        return y / jnp.maximum(n, 1e-12)
    return jnp.concatenate(
        (head(p["w1a"], p["b1a"], p["w2a"], p["b2a"]),
         head(p["w1b"], p["b1b"], p["w2b"], p["b2b"])), axis=-1)


if __name__ == "__main__":
    key = jax.random.PRNGKey(0)
    kx, kp, kx2, kp2 = jax.random.split(key, 4)

    # Small-head config -> fused block-diagonal path.
    B, dim, dim_hidden, n_way = 72, 32, 32, 8
    x = jax.random.normal(kx, (B, dim), jnp.float32)
    params = init_params(kp, dim, dim_hidden, n_way)
    ref = _reference(x, params)

    # f32 compute, default tiling (>=2 grid steps for megacore sharding).
    out = jax.block_until_ready(classifier_d_forward(x, params))
    assert out.shape == (B, 2 * n_way)
    assert jnp.allclose(out, ref, atol=1e-4, rtol=1e-4)

    # Multi-step batch grid (pipelining + batch padding 72 -> 96 rows).
    out_tiled = jax.block_until_ready(classifier_d_forward(x, params, block_b=32))
    assert jnp.allclose(out_tiled, ref, atol=1e-4, rtol=1e-4)

    # bf16 operand path (v6e/v7x MXU); f32 accumulation + f32 epilogue.
    out_bf16 = jax.block_until_ready(
        classifier_d_forward(x, params, compute_dtype=jnp.bfloat16))
    assert jnp.allclose(out_bf16, ref, atol=5e-2, rtol=5e-2)

    # bf16 output slab returned padded (halves HBM write traffic, no de-pad pass).
    out_slab = jax.block_until_ready(
        classifier_d_forward(x, params, out_dtype=jnp.bfloat16, return_padded=True))
    assert out_slab.shape[1] == 128
    assert jnp.allclose(out_slab[:B, :2 * n_way].astype(jnp.float32),
                        ref, atol=2e-2, rtol=2e-2)

    # Large, lane-aligned heads -> split second-GEMM path.
    B2, dim2, H2, n_way2 = 72, 32, 128, 128
    x2 = jax.random.normal(kx2, (B2, dim2), jnp.float32)
    params2 = init_params(kp2, dim2, H2, n_way2)
    ref2 = _reference(x2, params2)
    out2 = jax.block_until_ready(classifier_d_forward(x2, params2))
    assert out2.shape == (B2, 2 * n_way2)
    assert jnp.allclose(out2, ref2, atol=2e-3, rtol=2e-3)

    print("KERNEL_OK")
</pallas_src>

<mosaic_0001>
module attributes {stable_mosaic.version = 11 : i64} {
  func.func @kernel(%arg0: i32, %arg1: memref<40x32xf32, #tpu.memory_space<vmem>>, %arg2: memref<32x64xf32, #tpu.memory_space<vmem>>, %arg3: memref<1x64xf32, #tpu.memory_space<vmem>>, %arg4: memref<64x128xf32, #tpu.memory_space<vmem>>, %arg5: memref<1x128xf32, #tpu.memory_space<vmem>>, %arg6: memref<2x128xf32, #tpu.memory_space<vmem>>, %arg7: memref<40x128xf32, #tpu.memory_space<vmem>>) attributes {dimension_semantics = [#tpu.dimension_semantics<parallel>], iteration_bounds = array<i64: 2>, scalar_prefetch = 0 : i64, scratch_operands = 0 : i64, tpu.core_type = #tpu.core_type<tc>, window_params = [{transform_indices = @transform_0, window_bounds = array<i64: 40, 32>}, {pipeline_mode = #tpu.pipeline_mode<synchronous>, transform_indices = @transform_1, window_bounds = array<i64: 32, 64>}, {pipeline_mode = #tpu.pipeline_mode<synchronous>, transform_indices = @transform_2, window_bounds = array<i64: 1, 64>}, {pipeline_mode = #tpu.pipeline_mode<synchronous>, transform_indices = @transform_3, window_bounds = array<i64: 64, 128>}, {pipeline_mode = #tpu.pipeline_mode<synchronous>, transform_indices = @transform_4, window_bounds = array<i64: 1, 128>}, {pipeline_mode = #tpu.pipeline_mode<synchronous>, transform_indices = @transform_5, window_bounds = array<i64: 2, 128>}, {transform_indices = @transform_6, window_bounds = array<i64: 40, 128>}]} {
    %c0 = arith.constant 0 : index
    %c0_0 = arith.constant 0 : index
    %0 = vector.load %arg1[%c0, %c0_0] : memref<40x32xf32, #tpu.memory_space<vmem>>, vector<40x32xf32>
    %c0_1 = arith.constant 0 : index
    %c0_2 = arith.constant 0 : index
    %1 = vector.load %arg2[%c0_1, %c0_2] : memref<32x64xf32, #tpu.memory_space<vmem>>, vector<32x64xf32>
    %cst = arith.constant dense<0.000000e+00> : vector<40x64xf32>
    %2 = tpu.matmul %0, %1, %cst {dimension_numbers = #tpu.dot_dimension_numbers<[1], [0], [0], [1], [0, 0, 1, 1], [], []>} : vector<40x32xf32>, vector<32x64xf32>, vector<40x64xf32> -> vector<40x64xf32>
    %c0_3 = arith.constant 0 : index
    %c0_4 = arith.constant 0 : index
    %3 = vector.load %arg3[%c0_3, %c0_4] : memref<1x64xf32, #tpu.memory_space<vmem>>, vector<1x64xf32>
    %4 = vector.shape_cast %3 : vector<1x64xf32> to vector<64xf32>
    %5 = vector.shape_cast %4 : vector<64xf32> to vector<1x64xf32>
    %6 = vector.broadcast %5 : vector<1x64xf32> to vector<40x64xf32>
    %7 = arith.addf %2, %6 : vector<40x64xf32>
    %cst_5 = arith.constant 0.000000e+00 : f32
    %8 = vector.broadcast %cst_5 : f32 to vector<40x64xf32>
    %9 = arith.maximumf %7, %8 : vector<40x64xf32>
    %c0_6 = arith.constant 0 : index
    %c0_7 = arith.constant 0 : index
    %10 = vector.load %arg4[%c0_6, %c0_7] : memref<64x128xf32, #tpu.memory_space<vmem>>, vector<64x128xf32>
    %cst_8 = arith.constant dense<0.000000e+00> : vector<40x128xf32>
    %11 = tpu.matmul %9, %10, %cst_8 {dimension_numbers = #tpu.dot_dimension_numbers<[1], [0], [0], [1], [0, 0, 1, 1], [], []>} : vector<40x64xf32>, vector<64x128xf32>, vector<40x128xf32> -> vector<40x128xf32>
    %c0_9 = arith.constant 0 : index
    %c0_10 = arith.constant 0 : index
    %12 = vector.load %arg5[%c0_9, %c0_10] : memref<1x128xf32, #tpu.memory_space<vmem>>, vector<1x128xf32>
    %13 = vector.shape_cast %12 : vector<1x128xf32> to vector<128xf32>
    %14 = vector.shape_cast %13 : vector<128xf32> to vector<1x128xf32>
    %15 = vector.broadcast %14 : vector<1x128xf32> to vector<40x128xf32>
    %16 = arith.addf %11, %15 : vector<40x128xf32>
    %17 = arith.mulf %16, %16 : vector<40x128xf32>
    %c0_11 = arith.constant 0 : index
    %c0_12 = arith.constant 0 : index
    %18 = vector.load %arg6[%c0_11, %c0_12] : memref<2x128xf32, #tpu.memory_space<vmem>>, vector<1x128xf32>
    %c1 = arith.constant 1 : index
    %c0_13 = arith.constant 0 : index
    %19 = vector.load %arg6[%c1, %c0_13] : memref<2x128xf32, #tpu.memory_space<vmem>>, vector<1x128xf32>
    %cst_14 = arith.constant dense<0.000000e+00> : vector<40xf32>
    %20 = vector.multi_reduction <add>, %17, %cst_14 [1] : vector<40x128xf32> to vector<40xf32>
    %21 = vector.shape_cast %20 : vector<40xf32> to vector<40x1xf32>
    %22 = vector.broadcast %18 : vector<1x128xf32> to vector<40x128xf32>
    %23 = arith.mulf %17, %22 : vector<40x128xf32>
    %cst_15 = arith.constant dense<0.000000e+00> : vector<40xf32>
    %24 = vector.multi_reduction <add>, %23, %cst_15 [1] : vector<40x128xf32> to vector<40xf32>
    %25 = vector.shape_cast %24 : vector<40xf32> to vector<40x1xf32>
    %26 = arith.subf %21, %25 : vector<40x1xf32>
    %cst_16 = arith.constant 1.000000e-24 : f32
    %27 = vector.broadcast %cst_16 : f32 to vector<40x1xf32>
    %28 = arith.maximumf %25, %27 : vector<40x1xf32>
    %29 = math.rsqrt %28 : vector<40x1xf32>
    %cst_17 = arith.constant 1.000000e-24 : f32
    %30 = vector.broadcast %cst_17 : f32 to vector<40x1xf32>
    %31 = arith.maximumf %26, %30 : vector<40x1xf32>
    %32 = math.rsqrt %31 : vector<40x1xf32>
    %33 = vector.broadcast %18 : vector<1x128xf32> to vector<40x128xf32>
    %34 = vector.broadcast %29 : vector<40x1xf32> to vector<40x128xf32>
    %35 = arith.mulf %33, %34 : vector<40x128xf32>
    %36 = vector.broadcast %19 : vector<1x128xf32> to vector<40x128xf32>
    %37 = vector.broadcast %32 : vector<40x1xf32> to vector<40x128xf32>
    %38 = arith.mulf %36, %37 : vector<40x128xf32>
    %39 = arith.addf %35, %38 : vector<40x128xf32>
    %40 = arith.mulf %16, %39 : vector<40x128xf32>
    %c0_18 = arith.constant 0 : index
    %c0_19 = arith.constant 0 : index
    %41 = vector.load %arg7[%c0_18, %c0_19] : memref<40x128xf32, #tpu.memory_space<vmem>>, vector<40x128xf32>
    tpu.vector_store %arg7[%c0_18, %c0_19], %40 {strides = array<i32>} : memref<40x128xf32, #tpu.memory_space<vmem>>, vector<40x128xf32>,
    return
  }
  func.func @transform_0(%arg0: i32) -> (i32, i32) {
    %c0_i32 = arith.constant 0 : i32
    %c0_i32_0 = arith.constant 0 : i32
    return %arg0, %c0_i32 : i32, i32
  }
  func.func @transform_1(%arg0: i32) -> (i32, i32) {
    %c0_i32 = arith.constant 0 : i32
    %c0_i32_0 = arith.constant 0 : i32
    %c0_i32_1 = arith.constant 0 : i32
    return %c0_i32, %c0_i32_0 : i32, i32
  }
  func.func @transform_2(%arg0: i32) -> (i32, i32) {
    %c0_i32 = arith.constant 0 : i32
    %c0_i32_0 = arith.constant 0 : i32
    %c0_i32_1 = arith.constant 0 : i32
    return %c0_i32, %c0_i32_0 : i32, i32
  }
  func.func @transform_3(%arg0: i32) -> (i32, i32) {
    %c0_i32 = arith.constant 0 : i32
    %c0_i32_0 = arith.constant 0 : i32
    %c0_i32_1 = arith.constant 0 : i32
    return %c0_i32, %c0_i32_0 : i32, i32
  }
  func.func @transform_4(%arg0: i32) -> (i32, i32) {
    %c0_i32 = arith.constant 0 : i32
    %c0_i32_0 = arith.constant 0 : i32
    %c0_i32_1 = arith.constant 0 : i32
    return %c0_i32, %c0_i32_0 : i32, i32
  }
  func.func @transform_5(%arg0: i32) -> (i32, i32) {
    %c0_i32 = arith.constant 0 : i32
    %c0_i32_0 = arith.constant 0 : i32
    %c0_i32_1 = arith.constant 0 : i32
    return %c0_i32, %c0_i32_0 : i32, i32
  }
  func.func @transform_6(%arg0: i32) -> (i32, i32) {
    %c0_i32 = arith.constant 0 : i32
    %c0_i32_0 = arith.constant 0 : i32
    return %arg0, %c0_i32 : i32, i32
  }
}

</mosaic_0001>

<llo_original>
// kernel: tpu_custom_call.1
$region0: #{tpu_custom_call.1}
  #allocation0 [shape = 'u32[]', space=smem, size = 0x4, offset = 0x4, fixed_abs, tag = 'smem constant byte address 0x4 - core index']
  #allocation1 [shape = 'u32[144,128]{1,0:T(1,128)}', space=vmem, size = 0x12000, scoped, tag = 'internal scratch']
  %s0 = inlined_call_operand.vmem [shape: f32[80,32], index: 0, kind: input, shape index: {}]
  %s1 = inlined_call_operand.vmem [shape: f32[32,64], index: 1, kind: input, shape index: {}]
  %s2 = inlined_call_operand.vmem [shape: f32[1,64], index: 2, kind: input, shape index: {}]
  %s3 = inlined_call_operand.vmem [shape: f32[64,128], index: 3, kind: input, shape index: {}]
  %s4 = inlined_call_operand.vmem [shape: f32[1,128], index: 4, kind: input, shape index: {}]
  %s5 = inlined_call_operand.vmem [shape: f32[2,128], index: 5, kind: input, shape index: {}]
  %s6 = inlined_call_operand.hbm [shape: f32[80,128], index: 6, kind: output, shape index: {}]
  %s7 = sld [smem:[#allocation0]]
  $region57: #{tpu_custom_call.1} parent=0
    _
  %s9 = ssub.s32 1, %s7
  %s10 = scalar_select 0, %s9, %s7
  $region1: #{tpu_custom_call.1} parent=0
    #allocation2 [shape = 'u8[40960]{0}', space=vmem, size = 0xa000, scoped, tag = 'output window, operand 0']
    #allocation3 [shape = 's32[2]{0}', space=sflag, size = 0x8, scoped, tag = 'scoped memory for tpu_custom_call.1']
    %11 = vsyncpa [#allocation3], 0
    %s12 = scalar_lea.sflag [#allocation3], 1
    %13 = vsyncpa %s12, 0
    loop: start=0, step=1, limit=4
    $region2: #{tpu_custom_call.1} parent=1 // loop_pre_header
      _
    $region3: #{tpu_custom_call.1} parent=1 // loop_header
      %s15 = sphi 0, %s19
      %p16 = scmp.ge.s32.totalorder %s15, 4
      %s25 = sphi 0, %s27
      %s28 = sphi 0, %s25
      %s29 = sphi 0, %s28
      %s45 = sphi 0, %s29
      %s49 = sphi 0, %s49
      %s51 = sphi 0, %s49
      %s52 = sphi 0, %s51
      %s66 = sphi 0, %s52
      %s70 = sphi 0, %s70
      %s72 = sphi 0, %s70
      %s73 = sphi 0, %s72
      %s87 = sphi 0, %s73
      %s91 = sphi 0, %s91
      %s93 = sphi 0, %s91
      %s94 = sphi 0, %s93
      %s108 = sphi 0, %s94
      %s112 = sphi 0, %s112
      %s114 = sphi 0, %s112
      %s115 = sphi 0, %s114
      %s129 = sphi 0, %s115
      %s133 = sphi 0, %s133
      %s135 = sphi 0, %s133
      %s136 = sphi 0, %s135
      %s150 = sphi 0, %s136
      %s156 = sphi 0, %s158
      %s159 = sphi 0, %s156
      %s160 = sphi 0, %s159
      %s176 = sphi 0, %s160
    $region4: #{tpu_custom_call.1} parent=1 // loop_header_branch
      %18 = sbr.rel (%p16) target = $region8
    $region5: #{tpu_custom_call.1} parent=1 // loop_body
      %s20 = ssub.s32 %s15, 1
      %s21 = ssub.s32 %s15, 2
      %s22 = sadd.s32 %s15, 1
      %s23 = ssub.s32 %s15, %s22
      %p24 = scmp.eq.s32.totalorder %s23, 0
      %s26 = sadd.s32 %s25, 1
      %s27 = scalar_select %p24, %s25, %s26
      %p30 = pneg %p24
      %p31 = scmp.eq.s32.totalorder %s15, 1
      %p32 = por %p30, %p31
      %p33 = scmp.ne.s32.totalorder %s25, %s28
      %p34 = scmp.eq.s32.totalorder %s15, 0
      %p35 = por %p33, %p34
      %p36 = scmp.ne.s32.totalorder %s25, %s28
      %p37 = scmp.eq.s32.totalorder %s20, 1
      %p38 = por %p36, %p37
      %p39 = scmp.ne.s32.totalorder %s28, %s29
      %p40 = scmp.eq.s32.totalorder %s20, 0
      %p41 = por %p39, %p40
      %p42 = scmp.ne.s32.totalorder %s28, %s29
      %p43 = scmp.eq.s32.totalorder %s21, 1
      %p44 = por %p42, %p43
      %p46 = scmp.ne.s32.totalorder %s29, %s45
      %p47 = scmp.eq.s32.totalorder %s21, 0
      %p48 = por %p46, %p47
      %s50 = sadd.s32 %s49, 1
      %p53 = scmp.eq.s32.totalorder %s15, 1
      %p54 = scmp.ne.s32.totalorder %s49, %s51
      %p55 = scmp.eq.s32.totalorder %s15, 0
      %p56 = por %p54, %p55
      %p57 = scmp.ne.s32.totalorder %s49, %s51
      %p58 = scmp.eq.s32.totalorder %s20, 1
      %p59 = por %p57, %p58
      %p60 = scmp.ne.s32.totalorder %s51, %s52
      %p61 = scmp.eq.s32.totalorder %s20, 0
      %p62 = por %p60, %p61
      %p63 = scmp.ne.s32.totalorder %s51, %s52
      %p64 = scmp.eq.s32.totalorder %s21, 1
      %p65 = por %p63, %p64
      %p67 = scmp.ne.s32.totalorder %s52, %s66
      %p68 = scmp.eq.s32.totalorder %s21, 0
      %p69 = por %p67, %p68
      %s71 = sadd.s32 %s70, 1
      %p74 = scmp.eq.s32.totalorder %s15, 1
      %p75 = scmp.ne.s32.totalorder %s70, %s72
      %p76 = scmp.eq.s32.totalorder %s15, 0
      %p77 = por %p75, %p76
      %p78 = scmp.ne.s32.totalorder %s70, %s72
      %p79 = scmp.eq.s32.totalorder %s20, 1
      %p80 = por %p78, %p79
      %p81 = scmp.ne.s32.totalorder %s72, %s73
      %p82 = scmp.eq.s32.totalorder %s20, 0
      %p83 = por %p81, %p82
      %p84 = scmp.ne.s32.totalorder %s72, %s73
      %p85 = scmp.eq.s32.totalorder %s21, 1
      %p86 = por %p84, %p85
      %p88 = scmp.ne.s32.totalorder %s73, %s87
      %p89 = scmp.eq.s32.totalorder %s21, 0
      %p90 = por %p88, %p89
      %s92 = sadd.s32 %s91, 1
      %p95 = scmp.eq.s32.totalorder %s15, 1
      %p96 = scmp.ne.s32.totalorder %s91, %s93
      %p97 = scmp.eq.s32.totalorder %s15, 0
      %p98 = por %p96, %p97
      %p99 = scmp.ne.s32.totalorder %s91, %s93
      %p100 = scmp.eq.s32.totalorder %s20, 1
      %p101 = por %p99, %p100
      %p102 = scmp.ne.s32.totalorder %s93, %s94
      %p103 = scmp.eq.s32.totalorder %s20, 0
      %p104 = por %p102, %p103
      %p105 = scmp.ne.s32.totalorder %s93, %s94
      %p106 = scmp.eq.s32.totalorder %s21, 1
      %p107 = por %p105, %p106
      %p109 = scmp.ne.s32.totalorder %s94, %s108
      %p110 = scmp.eq.s32.totalorder %s21, 0
      %p111 = por %p109, %p110
      %s113 = sadd.s32 %s112, 1
      %p116 = scmp.eq.s32.totalorder %s15, 1
      %p117 = scmp.ne.s32.totalorder %s112, %s114
      %p118 = scmp.eq.s32.totalorder %s15, 0
      %p119 = por %p117, %p118
      %p120 = scmp.ne.s32.totalorder %s112, %s114
      %p121 = scmp.eq.s32.totalorder %s20, 1
      %p122 = por %p120, %p121
      %p123 = scmp.ne.s32.totalorder %s114, %s115
      %p124 = scmp.eq.s32.totalorder %s20, 0
      %p125 = por %p123, %p124
      %p126 = scmp.ne.s32.totalorder %s114, %s115
      %p127 = scmp.eq.s32.totalorder %s21, 1
      %p128 = por %p126, %p127
      %p130 = scmp.ne.s32.totalorder %s115, %s129
      %p131 = scmp.eq.s32.totalorder %s21, 0
      %p132 = por %p130, %p131
      %s134 = sadd.s32 %s133, 1
      %p137 = scmp.eq.s32.totalorder %s15, 1
      %p138 = scmp.ne.s32.totalorder %s133, %s135
      %p139 = scmp.eq.s32.totalorder %s15, 0
      %p140 = por %p138, %p139
      %p141 = scmp.ne.s32.totalorder %s133, %s135
      %p142 = scmp.eq.s32.totalorder %s20, 1
      %p143 = por %p141, %p142
      %p144 = scmp.ne.s32.totalorder %s135, %s136
      %p145 = scmp.eq.s32.totalorder %s20, 0
      %p146 = por %p144, %p145
      %p147 = scmp.ne.s32.totalorder %s135, %s136
      %p148 = scmp.eq.s32.totalorder %s21, 1
      %p149 = por %p147, %p148
      %p151 = scmp.ne.s32.totalorder %s136, %s150
      %p152 = scmp.eq.s32.totalorder %s21, 0
      %p153 = por %p151, %p152
      %s154 = ssub.s32 %s15, %s22
      %p155 = scmp.eq.s32.totalorder %s154, 0
      %s157 = sadd.s32 %s156, 1
      %s158 = scalar_select %p155, %s156, %s157
      %p161 = pneg %p155
      %p162 = scmp.eq.s32.totalorder %s15, 1
      %p163 = por %p161, %p162
      %p164 = scmp.ne.s32.totalorder %s156, %s159
      %p165 = scmp.eq.s32.totalorder %s15, 0
      %p166 = por %p164, %p165
      %p167 = scmp.ne.s32.totalorder %s156, %s159
      %p168 = scmp.eq.s32.totalorder %s20, 1
      %p169 = por %p167, %p168
      %p170 = scmp.ne.s32.totalorder %s159, %s160
      %p171 = scmp.eq.s32.totalorder %s20, 0
      %p172 = por %p170, %p171
      %p173 = scmp.ne.s32.totalorder %s159, %s160
      %p174 = scmp.eq.s32.totalorder %s21, 1
      %p175 = por %p173, %p174
      %p177 = scmp.ne.s32.totalorder %s160, %s176
      %p178 = scmp.eq.s32.totalorder %s21, 0
      %p179 = por %p177, %p178
      %p180 = scmp.le.s32.totalorder 1, %s15
      %p181 = scmp.lt.s32.totalorder %s15, 3
      %p182 = pnand %p180, %p181
      %p183 = pneg %p182
      // Predicated region
      $region9: #{tpu_custom_call.1} parent=5 // pred_check
        _
      $region10: #{tpu_custom_call.1} parent=5 // pred_check_branch
        %185 = sbr.rel (%p182) target = $region12
      $region11: #{tpu_custom_call.1} parent=5 // pred_region
        %s186 = ssub.s32 %s15, 1
        // Predicated region
        $region13: #{tpu_custom_call.1} parent=11 // pred_check
          %p187 = pneg %p62
        $region14: #{tpu_custom_call.1} parent=11 // pred_check_branch
          %189 = sbr.rel (%p187) target = $region16
        $region15: #{tpu_custom_call.1} parent=11 // pred_region
          _
        $region16: #{tpu_custom_call.1} parent=11 // pred_fallthru
          _
        // Predicated region
        $region17: #{tpu_custom_call.1} parent=11 // pred_check
          %p190 = pneg %p83
        $region18: #{tpu_custom_call.1} parent=11 // pred_check_branch
          %192 = sbr.rel (%p190) target = $region20
        $region19: #{tpu_custom_call.1} parent=11 // pred_region
          _
        $region20: #{tpu_custom_call.1} parent=11 // pred_fallthru
          _
        // Predicated region
        $region21: #{tpu_custom_call.1} parent=11 // pred_check
          %p193 = pneg %p104
        $region22: #{tpu_custom_call.1} parent=11 // pred_check_branch
          %195 = sbr.rel (%p193) target = $region24
        $region23: #{tpu_custom_call.1} parent=11 // pred_region
          _
        $region24: #{tpu_custom_call.1} parent=11 // pred_fallthru
          _
        // Predicated region
        $region25: #{tpu_custom_call.1} parent=11 // pred_check
          %p196 = pneg %p125
        $region26: #{tpu_custom_call.1} parent=11 // pred_check_branch
          %198 = sbr.rel (%p196) target = $region28
        $region27: #{tpu_custom_call.1} parent=11 // pred_region
          _
        $region28: #{tpu_custom_call.1} parent=11 // pred_fallthru
          _
        // Predicated region
        $region29: #{tpu_custom_call.1} parent=11 // pred_check
          %p199 = pneg %p146
        $region30: #{tpu_custom_call.1} parent=11 // pred_check_branch
          %201 = sbr.rel (%p199) target = $region32
        $region31: #{tpu_custom_call.1} parent=11 // pred_region
          _
        $region32: #{tpu_custom_call.1} parent=11 // pred_fallthru
          _
      $region12: #{tpu_custom_call.1} parent=5 // pred_fallthru
        _
      %p202 = scmp.lt.s32.totalorder %s15, 2
      // Predicated region
      $region33: #{tpu_custom_call.1} parent=5 // pred_check
        %p203 = pneg %p202
      $region34: #{tpu_custom_call.1} parent=5 // pred_check_branch
        %205 = sbr.rel (%p203) target = $region36
      $region35: #{tpu_custom_call.1} parent=5 // pred_region
        // Predicated region
        $region37: #{tpu_custom_call.1} parent=35 // pred_check
          %p206 = pneg %p35
        $region38: #{tpu_custom_call.1} parent=35 // pred_check_branch
          %208 = sbr.rel (%p206) target = $region40
        $region39: #{tpu_custom_call.1} parent=35 // pred_region
          %s209 = smul.u32 5, %s15
          %p210 = scmp.lt.s32.totalorder %s209, 9
          %s211 = scalar_select %p210, %s209, 9
          %s212 = smul.addr %s211, 8
          %s213 = scalar_lea.vmem %s0, %s212
          %s214 = smul.u32 5, %s15
        $region40: #{tpu_custom_call.1} parent=35 // pred_fallthru
          _
      $region36: #{tpu_custom_call.1} parent=5 // pred_fallthru
        _
      %p215 = scmp.le.s32.totalorder 1, %s15
      %p216 = scmp.lt.s32.totalorder %s15, 3
      %p217 = pnand %p215, %p216
      %p218 = pneg %p217
      // Predicated region
      $region41: #{tpu_custom_call.1} parent=5 // pred_check
        _
      $region42: #{tpu_custom_call.1} parent=5 // pred_check_branch
        %220 = sbr.rel (%p217) target = $region44
      $region43: #{tpu_custom_call.1} parent=5 // pred_region
        %s221 = ssub.s32 %s15, 1
        %s222 = smul.u32 5, %s20
        %p223 = scmp.lt.s32.totalorder %s222, 9
        %s224 = scalar_select %p223, %s222, 9
        %s225 = smul.addr %s224, 8
        %s226 = scalar_lea.vmem %s0, %s225
        %p227 = pneg %p41
        %p228 = pneg %p38
        %p229 = pneg %p62
        %p230 = pneg %p59
        %p231 = pneg %p83
        %p232 = pneg %p80
        %p233 = pneg %p104
        %p234 = pneg %p101
        %p235 = pneg %p125
        %p236 = pneg %p122
        %p237 = pneg %p146
        %p238 = pneg %p143
        %p239 = pneg %p172
        %p240 = pneg %p169
        %s241 = sand.u32 %s159, 1
        %s242 = scalar_lea.sflag [#allocation3], %s241
        %s243 = sand.u32 %s159, 1
        %s244 = smul.addr %s243, 40
        %s245 = scalar_lea.vmem [#allocation2], %s244
        %s246 = smul.u32 5, %s20
        %p247 = scmp.lt.s32.totalorder %s246, 9
        %s248 = scalar_select %p247, %s246, 9
        %s249 = smul.addr %s248, 8
        %s250 = scalar_lea.vmem %s0, %s249
        %s251 = smul.u32 5, %s20
        %s252 = smul.u32 5, %s20
        %v253 = vld [vmem:[%s250] sm:$0xff]
        %v254 = vld [vmem:[%s250 + $0x8] sm:$0xff]
        %v255 = vld [vmem:[%s250 + $0x10] sm:$0xff]
        %v256 = vld [vmem:[%s250 + $0x18] sm:$0xff]
        %v257 = vld [vmem:[%s250 + $0x20] sm:$0xff]
        %v258 = vld [vmem:[%s1] sm:$0xff]
        %v259 = vld [vmem:[%s1 + $0x8] sm:$0xff]
        %v260 = vld [vmem:[%s1 + $0x10] sm:$0xff]
        %v261 = vld [vmem:[%s1 + $0x18] sm:$0xff]
        %v262 = vld [vmem:[%s2] sm:$0x1]
        %v264 = vlaneseq
        %v265 = vshrl.u32 %v264, 7
        %v266 = vsub.s32 0, %v265
        %v267 = vrot.slane %v262, %v266
        %vm269 = vcmask 261120
        %v271 = vsel %vm269, %v253, 0
        %v274 = vsel %vm269, %v254, 0
        %v277 = vsel %vm269, %v255, 0
        %v280 = vsel %vm269, %v256, 0
        %v283 = vsel %vm269, %v257, 0
        %285 = vmatprep.subr.mxu0 0.0
        %286 = vmatpush1.msra.mxu0 0.0
        %287 = vmatprep.subr.mxu0 0.0
        %288 = vmatpush1.msra.mxu0 0.0
        %289 = vmatprep.subr.mxu0 0.0
        %290 = vmatpush1.msra.mxu0 0.0
        %291 = vmatprep.subr.mxu0 0.0
        %292 = vmatpush1.msra.mxu0 0.0
        %293 = vmatprep.subr.mxu0 0.0
        %294 = vmatpush1.msra.mxu0 0.0
        %295 = vmatprep.subr.mxu0 0.0
        %296 = vmatpush1.msra.mxu0 0.0
        %297 = vmatprep.subr.mxu0 0.0
        %298 = vmatpush1.msra.mxu0 0.0
        %299 = vmatprep.subr.mxu0 0.0
        %300 = vmatpush1.msra.mxu0 0.0
        %301 = vmatprep.subr.mxu0 0.0
        %302 = vmatpush1.msra.mxu0 0.0
        %303 = vmatprep.subr.mxu0 0.0
        %304 = vmatpush1.msra.mxu0 0.0
        %305 = vmatprep.subr.mxu0 0.0
        %306 = vmatpush1.msra.mxu0 0.0
        %307 = vmatprep.subr.mxu0 0.0
        %308 = vmatpush1.msra.mxu0 0.0
        %309 = vmatprep.subr.mxu0 0.0
        %310 = vmatpush1.msra.mxu0 %v261
        %311 = vmatprep.subr.mxu0 0.0
        %312 = vmatpush1.msra.mxu0 %v260
        %313 = vmatprep.subr.mxu0 0.0
        %314 = vmatpush1.msra.mxu0 %v259
        %315 = vmatprep.subr.mxu0 0.0
        %316 = vmatpush1.msra.mxu0 %v258
        %317 = vmatprep.subr.mxu0 0.0
        %318 = vmatpush2.msra.mxu0 0.0
        %319 = vmatprep.subr.mxu0 0.0
        %320 = vmatpush2.msra.mxu0 0.0
        %321 = vmatprep.subr.mxu0 0.0
        %322 = vmatpush2.msra.mxu0 0.0
        %323 = vmatprep.subr.mxu0 0.0
        %324 = vmatpush2.msra.mxu0 0.0
        %325 = vmatprep.subr.mxu0 0.0
        %326 = vmatpush2.msra.mxu0 0.0
        %327 = vmatprep.subr.mxu0 0.0
        %328 = vmatpush2.msra.mxu0 0.0
        %329 = vmatprep.subr.mxu0 0.0
        %330 = vmatpush2.msra.mxu0 0.0
        %331 = vmatprep.subr.mxu0 0.0
        %332 = vmatpush2.msra.mxu0 0.0
        %333 = vmatprep.subr.mxu0 0.0
        %334 = vmatpush2.msra.mxu0 0.0
        %335 = vmatprep.subr.mxu0 0.0
        %336 = vmatpush2.msra.mxu0 0.0
        %337 = vmatprep.subr.mxu0 0.0
        %338 = vmatpush2.msra.mxu0 0.0
        %339 = vmatprep.subr.mxu0 0.0
        %340 = vmatpush2.msra.mxu0 0.0
        %341 = vmatprep.subr.mxu0 0.0
        %342 = vmatpush2.msra.mxu0 0.0
        %343 = vmatprep.subr.mxu0 0.0
        %344 = vmatpush2.msra.mxu0 0.0
        %345 = vmatprep.subr.mxu0 0.0
        %346 = vmatpush2.msra.mxu0 0.0
        %347 = vmatprep.subr.mxu0 0.0
        %348 = vmatpush2.msra.mxu0 0.0
        %349 = vmatprep.mubr.f32.mxu0 0.0
        %350 = vmatmul.mubr.f32.gmra.mxu0 %v271
        %v351 = vpop.f32.mrf.mxu0
        %v352 = vadd.f32 %v267, %v351
        %v353 = vpop.f32.mrf.mxu0
        %354 = vmatprep.mubr.f32.mxu0 0.0
        %355 = vmatmul.mubr.f32.gmra.mxu0 %v274
        %v356 = vpop.f32.mrf.mxu0
        %v357 = vadd.f32 %v267, %v356
        %v358 = vpop.f32.mrf.mxu0
        %359 = vmatprep.mubr.f32.mxu0 0.0
        %360 = vmatmul.mubr.f32.gmra.mxu0 %v277
        %v361 = vpop.f32.mrf.mxu0
        %v362 = vadd.f32 %v267, %v361
        %v363 = vpop.f32.mrf.mxu0
        %364 = vmatprep.mubr.f32.mxu0 0.0
        %365 = vmatmul.mubr.f32.gmra.mxu0 %v280
        %v366 = vpop.f32.mrf.mxu0
        %v367 = vadd.f32 %v267, %v366
        %v368 = vpop.f32.mrf.mxu0
        %369 = vmatprep.mubr.f32.mxu0 0.0
        %370 = vmatmul.mubr.f32.gmra.mxu0 %v283
        %v371 = vpop.f32.mrf.mxu0
        %v372 = vadd.f32 %v267, %v371
        %v373 = vpop.f32.mrf.mxu0
        %374 = vdwg.mxu0
        %v375 = vmax.f32 %v352, 0.0
        %v376 = vmax.f32 %v357, 0.0
        %v377 = vmax.f32 %v362, 0.0
        %v378 = vmax.f32 %v367, 0.0
        %v379 = vmax.f32 %v372, 0.0
        %v380 = vld [vmem:[%s3] sm:$0xff]
        %v381 = vld [vmem:[%s3 + $0x8] sm:$0xff]
        %v382 = vld [vmem:[%s3 + $0x10] sm:$0xff]
        %v383 = vld [vmem:[%s3 + $0x18] sm:$0xff]
        %v384 = vld [vmem:[%s3 + $0x20] sm:$0xff]
        %v385 = vld [vmem:[%s3 + $0x28] sm:$0xff]
        %v386 = vld [vmem:[%s3 + $0x30] sm:$0xff]
        %v387 = vld [vmem:[%s3 + $0x38] sm:$0xff]
        %v388 = vld [vmem:[%s4] sm:$0x1]
        %v390 = vlaneseq
        %v391 = vshrl.u32 %v390, 7
        %v392 = vsub.s32 0, %v391
        %v393 = vrot.slane %v388, %v392
        %vm395 = vcmask 523264
        %v397 = vsel %vm395, %v375, 0
        %v400 = vsel %vm395, %v376, 0
        %v403 = vsel %vm395, %v377, 0
        %v406 = vsel %vm395, %v378, 0
        %v409 = vsel %vm395, %v379, 0
        %411 = vmatprep.subr.mxu0 0.0
        %412 = vmatpush1.msra.mxu0 0.0
        %413 = vmatprep.subr.mxu0 0.0
        %414 = vmatpush1.msra.mxu0 0.0
        %415 = vmatprep.subr.mxu0 0.0
        %416 = vmatpush1.msra.mxu0 0.0
        %417 = vmatprep.subr.mxu0 0.0
        %418 = vmatpush1.msra.mxu0 0.0
        %419 = vmatprep.subr.mxu0 0.0
        %420 = vmatpush1.msra.mxu0 0.0
        %421 = vmatprep.subr.mxu0 0.0
        %422 = vmatpush1.msra.mxu0 0.0
        %423 = vmatprep.subr.mxu0 0.0
        %424 = vmatpush1.msra.mxu0 0.0
        %425 = vmatprep.subr.mxu0 0.0
        %426 = vmatpush1.msra.mxu0 0.0
        %427 = vmatprep.subr.mxu0 0.0
        %428 = vmatpush1.msra.mxu0 %v387
        %429 = vmatprep.subr.mxu0 0.0
        %430 = vmatpush1.msra.mxu0 %v386
        %431 = vmatprep.subr.mxu0 0.0
        %432 = vmatpush1.msra.mxu0 %v385
        %433 = vmatprep.subr.mxu0 0.0
        %434 = vmatpush1.msra.mxu0 %v384
        %435 = vmatprep.subr.mxu0 0.0
        %436 = vmatpush1.msra.mxu0 %v383
        %437 = vmatprep.subr.mxu0 0.0
        %438 = vmatpush1.msra.mxu0 %v382
        %439 = vmatprep.subr.mxu0 0.0
        %440 = vmatpush1.msra.mxu0 %v381
        %441 = vmatprep.subr.mxu0 0.0
        %442 = vmatpush1.msra.mxu0 %v380
        %443 = vmatprep.subr.mxu0 0.0
        %444 = vmatpush2.msra.mxu0 0.0
        %445 = vmatprep.subr.mxu0 0.0
        %446 = vmatpush2.msra.mxu0 0.0
        %447 = vmatprep.subr.mxu0 0.0
        %448 = vmatpush2.msra.mxu0 0.0
        %449 = vmatprep.subr.mxu0 0.0
        %450 = vmatpush2.msra.mxu0 0.0
        %451 = vmatprep.subr.mxu0 0.0
        %452 = vmatpush2.msra.mxu0 0.0
        %453 = vmatprep.subr.mxu0 0.0
        %454 = vmatpush2.msra.mxu0 0.0
        %455 = vmatprep.subr.mxu0 0.0
        %456 = vmatpush2.msra.mxu0 0.0
        %457 = vmatprep.subr.mxu0 0.0
        %458 = vmatpush2.msra.mxu0 0.0
        %459 = vmatprep.subr.mxu0 0.0
        %460 = vmatpush2.msra.mxu0 0.0
        %461 = vmatprep.subr.mxu0 0.0
        %462 = vmatpush2.msra.mxu0 0.0
        %463 = vmatprep.subr.mxu0 0.0
        %464 = vmatpush2.msra.mxu0 0.0
        %465 = vmatprep.subr.mxu0 0.0
        %466 = vmatpush2.msra.mxu0 0.0
        %467 = vmatprep.subr.mxu0 0.0
        %468 = vmatpush2.msra.mxu0 0.0
        %469 = vmatprep.subr.mxu0 0.0
        %470 = vmatpush2.msra.mxu0 0.0
        %471 = vmatprep.subr.mxu0 0.0
        %472 = vmatpush2.msra.mxu0 0.0
        %473 = vmatprep.subr.mxu0 0.0
        %474 = vmatpush2.msra.mxu0 0.0
        %475 = vmatprep.mubr.f32.mxu0 0.0
        %476 = vmatmul.mubr.f32.gmra.mxu0 %v397
        %v477 = vpop.f32.mrf.mxu0
        %v478 = vadd.f32 %v393, %v477
        %v479 = vpop.f32.mrf.mxu0
        %480 = vmatprep.mubr.f32.mxu0 0.0
        %481 = vmatmul.mubr.f32.gmra.mxu0 %v400
        %v482 = vpop.f32.mrf.mxu0
        %v483 = vadd.f32 %v393, %v482
        %v484 = vpop.f32.mrf.mxu0
        %485 = vmatprep.mubr.f32.mxu0 0.0
        %486 = vmatmul.mubr.f32.gmra.mxu0 %v403
        %v487 = vpop.f32.mrf.mxu0
        %v488 = vadd.f32 %v393, %v487
        %v489 = vpop.f32.mrf.mxu0
        %490 = vmatprep.mubr.f32.mxu0 0.0
        %491 = vmatmul.mubr.f32.gmra.mxu0 %v406
        %v492 = vpop.f32.mrf.mxu0
        %v493 = vadd.f32 %v393, %v492
        %v494 = vpop.f32.mrf.mxu0
        %495 = vmatprep.mubr.f32.mxu0 0.0
        %496 = vmatmul.mubr.f32.gmra.mxu0 %v409
        %v497 = vpop.f32.mrf.mxu0
        %v498 = vadd.f32 %v393, %v497
        %v499 = vpop.f32.mrf.mxu0
        %500 = vdwg.mxu0
        %v501 = vmul.f32 %v478, %v478
        %v502 = vmul.f32 %v483, %v483
        %v503 = vmul.f32 %v488, %v488
        %v504 = vmul.f32 %v493, %v493
        %v505 = vmul.f32 %v498, %v498
        %v506 = vld [vmem:[%s5] sm:$0x1]
        %v507 = vld [vmem:[%s5 + $0x1] sm:$0x1]
        %508 = vadd.xlane.f32.xlu0 %v501
        %v509 = vpop.xlane.xlu0 %508
        %510 = vadd.xlane.f32.xlu0 %v502
        %v511 = vpop.xlane.xlu0 %510
        %512 = vadd.xlane.f32.xlu0 %v503
        %v513 = vpop.xlane.xlu0 %512
        %514 = vadd.xlane.f32.xlu0 %v504
        %v515 = vpop.xlane.xlu0 %514
        %516 = vadd.xlane.f32.xlu0 %v505
        %v517 = vpop.xlane.xlu0 %516
        %v518 = vlaneseq
        %v519 = vshrl.u32 %v518, 7
        %v520 = vsub.s32 0, %v519
        %v521 = vrot.slane %v506, %v520
        %v522 = vmul.f32 %v501, %v521
        %v523 = vmul.f32 %v502, %v521
        %v524 = vmul.f32 %v503, %v521
        %v525 = vmul.f32 %v504, %v521
        %v526 = vmul.f32 %v505, %v521
        %527 = vadd.xlane.f32.xlu0 %v522
        %v528 = vpop.xlane.xlu0 %527
        %529 = vadd.xlane.f32.xlu0 %v523
        %v530 = vpop.xlane.xlu0 %529
        %531 = vadd.xlane.f32.xlu0 %v524
        %v532 = vpop.xlane.xlu0 %531
        %533 = vadd.xlane.f32.xlu0 %v525
        %v534 = vpop.xlane.xlu0 %533
        %535 = vadd.xlane.f32.xlu0 %v526
        %v536 = vpop.xlane.xlu0 %535
        %v537 = vsub.f32 %v509, %v528
        %v538 = vsub.f32 %v511, %v530
        %v539 = vsub.f32 %v513, %v532
        %v540 = vsub.f32 %v515, %v534
        %v541 = vsub.f32 %v517, %v536
        %v542 = vmax.f32 %v528, 1e-24
        %v543 = vmax.f32 %v530, 1e-24
        %v544 = vmax.f32 %v532, 1e-24
        %v545 = vmax.f32 %v534, 1e-24
        %v546 = vmax.f32 %v536, 1e-24
        %v547 = vrsqrt.pop %v542
        %v548 = vrsqrt.pop %v543
        %v549 = vrsqrt.pop %v544
        %v550 = vrsqrt.pop %v545
        %v551 = vrsqrt.pop %v546
        %v552 = vmax.f32 %v537, 1e-24
        %v553 = vmax.f32 %v538, 1e-24
        %v554 = vmax.f32 %v539, 1e-24
        %v555 = vmax.f32 %v540, 1e-24
        %v556 = vmax.f32 %v541, 1e-24
        %v557 = vrsqrt.pop %v552
        %v558 = vrsqrt.pop %v553
        %v559 = vrsqrt.pop %v554
        %v560 = vrsqrt.pop %v555
        %v561 = vrsqrt.pop %v556
        %v562 = vmul.f32 %v521, %v547
        %v563 = vmul.f32 %v521, %v548
        %v564 = vmul.f32 %v521, %v549
        %v565 = vmul.f32 %v521, %v550
        %v566 = vmul.f32 %v521, %v551
        %v567 = vlaneseq
        %v568 = vshrl.u32 %v567, 7
        %v569 = vsub.s32 0, %v568
        %v570 = vrot.slane %v507, %v569
        %v571 = vmul.f32 %v570, %v557
        %v572 = vmul.f32 %v570, %v558
        %v573 = vmul.f32 %v570, %v559
        %v574 = vmul.f32 %v570, %v560
        %v575 = vmul.f32 %v570, %v561
        %v576 = vadd.f32 %v562, %v571
        %v577 = vadd.f32 %v563, %v572
        %v578 = vadd.f32 %v564, %v573
        %v579 = vadd.f32 %v565, %v574
        %v580 = vadd.f32 %v566, %v575
        %v581 = vmul.f32 %v478, %v576
        %v582 = vmul.f32 %v483, %v577
        %v583 = vmul.f32 %v488, %v578
        %v584 = vmul.f32 %v493, %v579
        %v585 = vmul.f32 %v498, %v580
        %586 = vst [vmem:[%s245] sm:$0xff] %v581
        %587 = vst [vmem:[%s245 + $0x8] sm:$0xff] %v582
        %588 = vst [vmem:[%s245 + $0x10] sm:$0xff] %v583
        %589 = vst [vmem:[%s245 + $0x18] sm:$0xff] %v584
        %590 = vst [vmem:[%s245 + $0x20] sm:$0xff] %v585
        %s591 = sand.u32 %s159, 1
        %s592 = scalar_lea.sflag [#allocation3], %s591
        %s593 = sand.u32 %s159, 1
        %s594 = smul.addr %s593, 40
        %s595 = scalar_lea.vmem [#allocation2], %s594
        // Predicated region
        $region45: #{tpu_custom_call.1} parent=43 // pred_check
          %p596 = pneg %p169
        $region46: #{tpu_custom_call.1} parent=43 // pred_check_branch
          %598 = sbr.rel (%p596) target = $region48
        $region47: #{tpu_custom_call.1} parent=43 // pred_region
          %s599 = smul.u32 5, %s20
          %s601 = ssub.s32 640, 640
          %602 = vsyncadd %s592, %s601
          %s603 = smul.addr %s599, 128
          %s604 = scalar_lea.hbm %s6, %s603
          %s605 = sshll.u32 %s595, 4
          %s606 = int_to_ptr.vmem [resolvable:$true] %s605
          %611 = dma.vmem_to_hbm [thread:$0]  %s606, 640, %s604, %s592, 128, 128, 8
        $region48: #{tpu_custom_call.1} parent=43 // pred_fallthru
          _
      $region44: #{tpu_custom_call.1} parent=5 // pred_fallthru
        _
      %p612 = scmp.le.s32.totalorder 2, %s15
      // Predicated region
      $region49: #{tpu_custom_call.1} parent=5 // pred_check
        %p613 = pneg %p612
      $region50: #{tpu_custom_call.1} parent=5 // pred_check_branch
        %615 = sbr.rel (%p613) target = $region52
      $region51: #{tpu_custom_call.1} parent=5 // pred_region
        %s616 = ssub.s32 %s15, 2
        // Predicated region
        $region53: #{tpu_custom_call.1} parent=51 // pred_check
          %p617 = pneg %p175
        $region54: #{tpu_custom_call.1} parent=51 // pred_check_branch
          %619 = sbr.rel (%p617) target = $region56
        $region55: #{tpu_custom_call.1} parent=51 // pred_region
          %s620 = sand.u32 %s160, 1
          %s621 = scalar_lea.sflag [#allocation3], %s620
          %s622 = sand.u32 %s160, 1
          %s623 = smul.addr %s622, 40
          %s624 = scalar_lea.vmem [#allocation2], %s623
          %625 = dma.done %s621, 640
        $region56: #{tpu_custom_call.1} parent=51 // pred_fallthru
          _
      $region52: #{tpu_custom_call.1} parent=5 // pred_fallthru
        _
    $region6: #{tpu_custom_call.1} parent=1 // loop_footer
      %s19 = sadd.s32 1, %s15
    $region7: #{tpu_custom_call.1} parent=1 // loop_footer_branch
      %14 = sbr.rel target = $region3
    $region8: #{tpu_custom_call.1} parent=1 // loop_exit
      _
    %626 = vsyncpa [#allocation3], 1
    %s627 = scalar_lea.sflag [#allocation3], 1
    %628 = vsyncpa %s627, 1

</llo_original>
